<compile_context>
chip_gen: v5e
topology: v5e:2x2
jax: 0.10.0
libtpu: 0.0.40
codegen_flags: <defaults>
</compile_context>

<pallas_src>
import jax
import jax.numpy as jnp
from jax.experimental import pallas as pl
from jax.experimental.pallas import tpu as pltpu


_LANE = 128      # vreg lane width
_SUBLANE = 8     # f32 sublane count


def _round_up(n: int, m: int) -> int:
    return ((n + m - 1) // m) * m


def _choose_tb(batch: int, max_tb: int) -> int:
    """Pick the batch tile: multiple of 128 (lane-dense transposed output),
    large (fewer grid steps), but >= 2 grid steps when possible (v7x)."""
    if batch < _LANE:
        # Single full-array tile; the (8,128) rule is waived for full dims.
        return batch
    cap = max(_LANE, (max_tb // _LANE) * _LANE)
    bp = _round_up(batch, _LANE)
    if bp <= cap:
        if bp >= 2 * _LANE:
            # Split into >= 2 grid steps so both v7x TensorCores get work
            # under dimension_semantics=("parallel",).
            return _round_up(bp // 2, _LANE)
        return bp            # batch in [128, 255]: one 128-row tile
    return cap


def _mlp_kernel(x_ref, w1_ref, b1_ref, w2t_ref, b2_ref, o_ref):
    # x_ref:   (TB, F)   f32   flattened reference points (batch tile)
    # w1_ref:  (F,  Hp)  bf16  layer-1 weights, hidden lane-padded to 128
    # b1_ref:  (1,  Hp)  f32
    # w2t_ref: (Cq, Hp)  bf16  layer-2 weights, transposed, Cq = round_up(C,8)
    # b2_ref:  (Cq, 1)   f32
    # o_ref:   (Cq, TB)  f32   logits, transposed (classes x batch)
    x = x_ref[...].astype(w1_ref.dtype)                   # f32->bf16 on the VPU
    h = jnp.dot(x, w1_ref[...],
                preferred_element_type=jnp.float32) + b1_ref[...]
    h = jnp.maximum(h, 0.0).astype(w2t_ref.dtype)         # ReLU in f32, back to bf16
    # y^T = w2^T @ h^T : contract the last dim of both operands ("NT" matmul);
    # the MXU consumes the transposed RHS directly, no h^T materialized.
    y_t = jax.lax.dot_general(
        w2t_ref[...], h,
        dimension_numbers=(((1,), (1,)), ((), ())),
        preferred_element_type=jnp.float32)
    o_ref[...] = (y_t + b2_ref[...]).astype(o_ref.dtype)


def prepare_params(params, *, use_bf16=True):
    """Pad / cast / transpose the MLP parameters ONCE, outside the hot path."""
    w1 = jnp.asarray(params["w1"])
    b1 = jnp.asarray(params["b1"])
    w2 = jnp.asarray(params["w2"])
    b2 = jnp.asarray(params["b2"])
    F, H = w1.shape
    C = w2.shape[1]
    Hp = _round_up(H, _LANE)        # hidden lane-padded to 128 (lane-dense h)
    Cq = _round_up(C, _SUBLANE)     # classes padded only to the 8-row sublane
    mxu_dtype = jnp.bfloat16 if use_bf16 else jnp.float32
    w1_p = jnp.zeros((F, Hp), mxu_dtype).at[:, :H].set(w1.astype(mxu_dtype))
    b1_p = jnp.zeros((1, Hp), jnp.float32).at[0, :H].set(b1.astype(jnp.float32))
    w2t_p = jnp.zeros((Cq, Hp), mxu_dtype).at[:C, :H].set(w2.T.astype(mxu_dtype))
    b2_p = jnp.zeros((Cq, 1), jnp.float32).at[:C, 0].set(b2.astype(jnp.float32))
    return {"w1": w1_p, "b1": b1_p, "w2t": w2t_p, "b2": b2_p,
            "F": F, "H": H, "C": C, "Hp": Hp, "Cq": Cq}


def predictor_each_forward(x, filters, prepared, *, max_tb=2048):
    """Equivalent of PredictorEach.forward with a 2-layer MLP `each`.

    Args:
      x: (batch, num_ref, 2) float32
      filters: dict of CNN filters (passed through unchanged, no compute)
      prepared: output of prepare_params() (padded / bf16 / transposed weights)
      max_tb: upper bound on the per-grid-step batch tile (keep <= ~4096 on
              v5e to stay under the 16 MiB scoped-VMEM default).
    Returns:
      (logits of shape (batch, num_classes), filters)
    """
    # TODO(synk): `each` is a generic nn.Module in the original code; only the
    # flatten->Linear->ReLU->Linear head is implemented here.
    B, num_ref, two = x.shape
    F = prepared["F"]
    assert num_ref * two == F
    Hp, Cq, C = prepared["Hp"], prepared["Cq"], prepared["C"]

    x_flat = x.reshape(B, F)            # metadata reshape only; no pad / cast
    TB = _choose_tb(B, max_tb)
    grid = (pl.cdiv(B, TB),)

    op_bytes = prepared["w1"].dtype.itemsize
    cost = pl.CostEstimate(
        flops=2 * B * (F * Hp + Hp * Cq),
        transcendentals=0,
        bytes_accessed=(B * F * 4                        # x in (f32)
                        + Cq * B * 4                     # transposed out (f32)
                        + (F * Hp + Cq * Hp) * op_bytes  # weights
                        + (Hp + Cq) * 4),                # biases
    )

    out_t = pl.pallas_call(
        _mlp_kernel,
        out_shape=jax.ShapeDtypeStruct((Cq, B), jnp.float32),
        grid_spec=pltpu.PrefetchScalarGridSpec(
            num_scalar_prefetch=0,
            grid=grid,
            in_specs=[
                pl.BlockSpec((TB, F), lambda i: (i, 0)),    # x tile per step
                pl.BlockSpec((F, Hp), lambda i: (0, 0)),    # weights VMEM-resident
                pl.BlockSpec((1, Hp), lambda i: (0, 0)),
                pl.BlockSpec((Cq, Hp), lambda i: (0, 0)),
                pl.BlockSpec((Cq, 1), lambda i: (0, 0)),
            ],
            out_specs=pl.BlockSpec((Cq, TB), lambda i: (0, i)),
        ),
        compiler_params=pltpu.CompilerParams(
            dimension_semantics=("parallel",)),
        cost_estimate=cost,
    )(x_flat, prepared["w1"], prepared["b1"], prepared["w2t"], prepared["b2"])

    # (Cq, B) -> (B, C); reads only ~Cq*4 = 64 B per row (was 512 B/row).
    logits = out_t[:C, :].T.astype(x.dtype)
    # `filters` is pure pass-through in PredictorEach / the wrapped module.
    return logits, filters


if __name__ == "__main__":
    key = jax.random.PRNGKey(0)
    k_x, k_w1, k_b1, k_w2, k_b2, k_f = jax.random.split(key, 6)

    batch = 2
    num_ref = 8          # -> flattened feature dim F = 16
    hidden = 32
    num_classes = 10

    x = jax.random.normal(k_x, (batch, num_ref, 2), dtype=jnp.float32)

    F = num_ref * 2
    params = {
        "w1": jax.random.normal(k_w1, (F, hidden), dtype=jnp.float32) * 0.1,
        "b1": jax.random.normal(k_b1, (hidden,), dtype=jnp.float32) * 0.01,
        "w2": jax.random.normal(k_w2, (hidden, num_classes), dtype=jnp.float32) * 0.1,
        "b2": jax.random.normal(k_b2, (num_classes,), dtype=jnp.float32) * 0.01,
    }
    # Synthetic "filters" dict (CNN filters PredictorEach just threads through).
    filters = {
        "conv1": jax.random.normal(k_f, (4, 2, 3, 3), dtype=jnp.float32),
    }

    prepared = prepare_params(params)     # one-time pad / cast / transpose
    logits, filters_out = predictor_each_forward(x, filters, prepared)
    jax.block_until_ready(logits)

    # Reference in plain JAX using the same bf16-operand / f32-accumulate math.
    x_flat = x.reshape(batch, F)
    h_ref = jnp.dot(x_flat.astype(jnp.bfloat16),
                    params["w1"].astype(jnp.bfloat16),
                    preferred_element_type=jnp.float32) + params["b1"]
    h_ref = jnp.maximum(h_ref, 0.0)
    ref = jnp.dot(h_ref.astype(jnp.bfloat16),
                  params["w2"].astype(jnp.bfloat16),
                  preferred_element_type=jnp.float32) + params["b2"]

    assert logits.shape == (batch, num_classes)
    assert jnp.allclose(logits, ref, atol=1e-3, rtol=1e-3)
    assert filters_out is filters  # pass-through semantics

    print("KERNEL_OK")
</pallas_src>

<mosaic_0001>
module attributes {stable_mosaic.version = 11 : i64} {
  func.func @_mlp_kernel(%arg0: i32, %arg1: memref<2x16xf32, #tpu.memory_space<vmem>>, %arg2: memref<16x128xbf16, #tpu.memory_space<vmem>>, %arg3: memref<1x128xf32, #tpu.memory_space<vmem>>, %arg4: memref<16x128xbf16, #tpu.memory_space<vmem>>, %arg5: memref<16x1xf32, #tpu.memory_space<vmem>>, %arg6: memref<16x2xf32, #tpu.memory_space<vmem>>) attributes {dimension_semantics = [#tpu.dimension_semantics<parallel>], iteration_bounds = array<i64: 1>, scalar_prefetch = 0 : i64, scratch_operands = 0 : i64, tpu.core_type = #tpu.core_type<tc>, window_params = [{transform_indices = @transform_0, window_bounds = array<i64: 2, 16>}, {pipeline_mode = #tpu.pipeline_mode<synchronous>, transform_indices = @transform_1, window_bounds = array<i64: 16, 128>}, {pipeline_mode = #tpu.pipeline_mode<synchronous>, transform_indices = @transform_2, window_bounds = array<i64: 1, 128>}, {pipeline_mode = #tpu.pipeline_mode<synchronous>, transform_indices = @transform_3, window_bounds = array<i64: 16, 128>}, {pipeline_mode = #tpu.pipeline_mode<synchronous>, transform_indices = @transform_4, window_bounds = array<i64: 16, 1>}, {transform_indices = @transform_5, window_bounds = array<i64: 16, 2>}]} {
    %c0 = arith.constant 0 : index
    %c0_0 = arith.constant 0 : index
    %0 = vector.load %arg1[%c0, %c0_0] : memref<2x16xf32, #tpu.memory_space<vmem>>, vector<2x16xf32>
    %1 = arith.truncf %0 : vector<2x16xf32> to vector<2x16xbf16>
    %c0_1 = arith.constant 0 : index
    %c0_2 = arith.constant 0 : index
    %2 = vector.load %arg2[%c0_1, %c0_2] : memref<16x128xbf16, #tpu.memory_space<vmem>>, vector<16x128xbf16>
    %cst = arith.constant dense<0.000000e+00> : vector<2x128xf32>
    %3 = tpu.matmul %1, %2, %cst {dimension_numbers = #tpu.dot_dimension_numbers<[1], [0], [0], [1], [0, 0, 1, 1], [], []>} : vector<2x16xbf16>, vector<16x128xbf16>, vector<2x128xf32> -> vector<2x128xf32>
    %c0_3 = arith.constant 0 : index
    %c0_4 = arith.constant 0 : index
    %4 = vector.load %arg3[%c0_3, %c0_4] : memref<1x128xf32, #tpu.memory_space<vmem>>, vector<1x128xf32>
    %5 = vector.broadcast %4 : vector<1x128xf32> to vector<2x128xf32>
    %6 = arith.addf %3, %5 : vector<2x128xf32>
    %cst_5 = arith.constant 0.000000e+00 : f32
    %7 = vector.broadcast %cst_5 : f32 to vector<2x128xf32>
    %8 = arith.maximumf %6, %7 : vector<2x128xf32>
    %9 = arith.truncf %8 : vector<2x128xf32> to vector<2x128xbf16>
    %c0_6 = arith.constant 0 : index
    %c0_7 = arith.constant 0 : index
    %10 = vector.load %arg4[%c0_6, %c0_7] : memref<16x128xbf16, #tpu.memory_space<vmem>>, vector<16x128xbf16>
    %cst_8 = arith.constant dense<0.000000e+00> : vector<16x2xf32>
    %11 = tpu.matmul %10, %9, %cst_8 {dimension_numbers = #tpu.dot_dimension_numbers<[1], [1], [0], [0], [0, 0, 1, 0], [], []>} : vector<16x128xbf16>, vector<2x128xbf16>, vector<16x2xf32> -> vector<16x2xf32>
    %c0_9 = arith.constant 0 : index
    %c0_10 = arith.constant 0 : index
    %12 = vector.load %arg5[%c0_9, %c0_10] : memref<16x1xf32, #tpu.memory_space<vmem>>, vector<16x1xf32>
    %13 = vector.broadcast %12 : vector<16x1xf32> to vector<16x2xf32>
    %14 = arith.addf %11, %13 : vector<16x2xf32>
    %c0_11 = arith.constant 0 : index
    %c0_12 = arith.constant 0 : index
    %15 = vector.load %arg6[%c0_11, %c0_12] : memref<16x2xf32, #tpu.memory_space<vmem>>, vector<16x2xf32>
    tpu.vector_store %arg6[%c0_11, %c0_12], %14 {strides = array<i32>} : memref<16x2xf32, #tpu.memory_space<vmem>>, vector<16x2xf32>,
    return
  }
  func.func @transform_0(%arg0: i32) -> (i32, i32) {
    %c0_i32 = arith.constant 0 : i32
    %c0_i32_0 = arith.constant 0 : i32
    return %arg0, %c0_i32 : i32, i32
  }
  func.func @transform_1(%arg0: i32) -> (i32, i32) {
    %c0_i32 = arith.constant 0 : i32
    %c0_i32_0 = arith.constant 0 : i32
    %c0_i32_1 = arith.constant 0 : i32
    return %c0_i32, %c0_i32_0 : i32, i32
  }
  func.func @transform_2(%arg0: i32) -> (i32, i32) {
    %c0_i32 = arith.constant 0 : i32
    %c0_i32_0 = arith.constant 0 : i32
    %c0_i32_1 = arith.constant 0 : i32
    return %c0_i32, %c0_i32_0 : i32, i32
  }
  func.func @transform_3(%arg0: i32) -> (i32, i32) {
    %c0_i32 = arith.constant 0 : i32
    %c0_i32_0 = arith.constant 0 : i32
    %c0_i32_1 = arith.constant 0 : i32
    return %c0_i32, %c0_i32_0 : i32, i32
  }
  func.func @transform_4(%arg0: i32) -> (i32, i32) {
    %c0_i32 = arith.constant 0 : i32
    %c0_i32_0 = arith.constant 0 : i32
    %c0_i32_1 = arith.constant 0 : i32
    return %c0_i32, %c0_i32_0 : i32, i32
  }
  func.func @transform_5(%arg0: i32) -> (i32, i32) {
    %c0_i32 = arith.constant 0 : i32
    %c0_i32_0 = arith.constant 0 : i32
    return %c0_i32, %arg0 : i32, i32
  }
}

</mosaic_0001>

<llo_original>
// kernel: tpu_custom_call.1
$region0: #{tpu_custom_call.1}
  #allocation0 [shape = 'u32[]', space=smem, size = 0x4, offset = 0x4, fixed_abs, tag = 'smem constant byte address 0x4 - core index']
  #allocation1 [shape = 'u32[72,128]{1,0:T(1,128)}', space=vmem, size = 0x9000, scoped, tag = 'internal scratch']
  %s0 = inlined_call_operand.hbm [shape: f32[2,16], index: 0, kind: input, shape index: {}]
  %s1 = inlined_call_operand.vmem [shape: bf16[16,128], index: 1, kind: input, shape index: {}]
  %s2 = inlined_call_operand.vmem [shape: f32[1,128], index: 2, kind: input, shape index: {}]
  %s3 = inlined_call_operand.vmem [shape: bf16[16,128], index: 3, kind: input, shape index: {}]
  %s4 = inlined_call_operand.vmem [shape: f32[16,1], index: 4, kind: input, shape index: {}]
  %s5 = inlined_call_operand.vmem [shape: f32[16,2], index: 5, kind: output, shape index: {}]
  %s6 = sld [smem:[#allocation0]]
  $region34: #{tpu_custom_call.1} parent=0
    _
  %s8 = ssub.s32 1, %s6
  %s9 = scalar_select 0, %s8, %s6
  $region1: #{tpu_custom_call.1} parent=0
    #allocation2 [shape = 'u8[1024]{0}', space=vmem, size = 0x400, scoped, tag = 'input window, operand 0, single buffered']
    #allocation3 [shape = 's32[1]{0}', space=sflag, size = 0x4, scoped, tag = 'scoped memory for tpu_custom_call.1']
    %10 = vsyncpa [#allocation3], 0
    // Predicated region
    $region2: #{tpu_custom_call.1} parent=1 // pred_check
      _
    $region3: #{tpu_custom_call.1} parent=1 // pred_check_branch
      %12 = sbr.rel (0) target = $region5
    $region4: #{tpu_custom_call.1} parent=1 // pred_region
      %14 = vsyncadd [#allocation3], 0
      %s16 = sshll.u32 %s0, 4
      %s17 = int_to_ptr.hbm [resolvable:$true] %s16
      %s18 = sshll.u32 [#allocation2], 4
      %s19 = int_to_ptr.vmem [resolvable:$true] %s18
      %21 = dma.hbm_to_vmem [thread:$0]  %s17, 32, %s19, [#allocation3]
    $region5: #{tpu_custom_call.1} parent=1 // pred_fallthru
      _
    // Predicated region
    $region6: #{tpu_custom_call.1} parent=1 // pred_check
      _
    $region7: #{tpu_custom_call.1} parent=1 // pred_check_branch
      %23 = sbr.rel (0) target = $region9
    $region8: #{tpu_custom_call.1} parent=1 // pred_region
      _
    $region9: #{tpu_custom_call.1} parent=1 // pred_fallthru
      _
    // Predicated region
    $region10: #{tpu_custom_call.1} parent=1 // pred_check
      _
    $region11: #{tpu_custom_call.1} parent=1 // pred_check_branch
      %25 = sbr.rel (0) target = $region13
    $region12: #{tpu_custom_call.1} parent=1 // pred_region
      _
    $region13: #{tpu_custom_call.1} parent=1 // pred_fallthru
      _
    // Predicated region
    $region14: #{tpu_custom_call.1} parent=1 // pred_check
      _
    $region15: #{tpu_custom_call.1} parent=1 // pred_check_branch
      %27 = sbr.rel (0) target = $region17
    $region16: #{tpu_custom_call.1} parent=1 // pred_region
      _
    $region17: #{tpu_custom_call.1} parent=1 // pred_fallthru
      _
    // Predicated region
    $region18: #{tpu_custom_call.1} parent=1 // pred_check
      _
    $region19: #{tpu_custom_call.1} parent=1 // pred_check_branch
      %29 = sbr.rel (0) target = $region21
    $region20: #{tpu_custom_call.1} parent=1 // pred_region
      _
    $region21: #{tpu_custom_call.1} parent=1 // pred_fallthru
      _
    // Predicated region
    $region22: #{tpu_custom_call.1} parent=1 // pred_check
      _
    $region23: #{tpu_custom_call.1} parent=1 // pred_check_branch
      %31 = sbr.rel (0) target = $region25
    $region24: #{tpu_custom_call.1} parent=1 // pred_region
      %33 = dma.done [#allocation3], 32
    $region25: #{tpu_custom_call.1} parent=1 // pred_fallthru
      _
    %v35 = vld [vmem:[#allocation2] sm:$0x3]
    %v36 = vpack.c.bf16 %v35, %v35
    %v37 = vld [vmem:[%s1] sm:$0xf]
    %v38 = vld [vmem:[%s1 + $0x4] sm:$0xf]
    %v39 = vld [vmem:[%s2] sm:$0x1]
    %v41 = vperm.slane %v39, 0
    %v45 = vunpack.c.l.b16 %v37
    %v46 = vunpack.c.l.b16 %v38
    %v47 = vpack.c.b16 %v46, %v45
    %vm49 = vcmask 130048
    %v51 = vsel %vm49, %v36, 0
    %53 = vmatpush.bf16.msra.mxu0 0
    %54 = vmatpush.bf16.msra.mxu0 0
    %55 = vmatpush.bf16.msra.mxu0 0
    %56 = vmatpush.bf16.msra.mxu0 0
    %57 = vmatpush.bf16.msra.mxu0 0
    %58 = vmatpush.bf16.msra.mxu0 0
    %59 = vmatpush.bf16.msra.mxu0 0
    %60 = vmatpush.bf16.msra.mxu0 %v47
    %61 = vmatmul.bf16.gmra.mxu0 %v51
    %v62 = vpop.f32.mrf.mxu0
    %v63 = vadd.f32 %v41, %v62
    %v64 = vpop.f32.mrf.mxu0
    %65 = vdwg.mxu0
    %v66 = vmax.f32 %v63, 0.0
    %v67 = vpack.c.bf16 %v66, %v66
    %v68 = vld [vmem:[%s3] sm:$0xf]
    %v69 = vld [vmem:[%s3 + $0x4] sm:$0xf]
    %v70 = vld [vmem:[%s4] sm:$0xff]
    %v71 = vld [vmem:[%s4 + $0x8] sm:$0xff]
    %73 = vset.pattern.permute.xlu0 0
    %74 = vperm.xlu0 %73, %v70
    %v75 = vpop.permute.xlu0 %74
    %78 = vset.pattern.permute.xlu0 0
    %79 = vperm.xlu0 %78, %v71
    %v80 = vpop.permute.xlu0 %79
    %v84 = vunpack.c.l.b16 %v68
    %v85 = vunpack.c.l.b16 %v69
    %v86 = vpack.c.b16 %v85, %v84
    %88 = vmatpush.bf16.xpose.msra.mxu0 0
    %89 = vmatpush.bf16.xpose.msra.mxu0 0
    %90 = vmatpush.bf16.xpose.msra.mxu0 0
    %91 = vmatpush.bf16.xpose.msra.mxu0 0
    %92 = vmatpush.bf16.xpose.msra.mxu0 0
    %93 = vmatpush.bf16.xpose.msra.mxu0 0
    %94 = vmatpush.bf16.xpose.msra.mxu0 0
    %95 = vmatpush.bf16.xpose.msra.mxu0 %v67
    %96 = vmatmul.bf16.gmra.mxu0 %v86
    %v97 = vpop.f32.mrf.mxu0
    %v98 = vadd.f32 %v75, %v97
    %v99 = vpop.f32.mrf.mxu0
    %v100 = vadd.f32 %v80, %v99
    %101 = vdwg.mxu0
    %vm102 = vcmask 15360
    %103 = vst.msk [vmem:[%s5] sm:$0xff] %vm102, %v98
    %104 = vst.msk [vmem:[%s5 + $0x8] sm:$0xff] %vm102, %v100
    // Predicated region
    $region26: #{tpu_custom_call.1} parent=1 // pred_check
      _
    $region27: #{tpu_custom_call.1} parent=1 // pred_check_branch
      %106 = sbr.rel (0) target = $region29
    $region28: #{tpu_custom_call.1} parent=1 // pred_region
      _
    $region29: #{tpu_custom_call.1} parent=1 // pred_fallthru
      _
    // Predicated region
    $region30: #{tpu_custom_call.1} parent=1 // pred_check
      _
    $region31: #{tpu_custom_call.1} parent=1 // pred_check_branch
      %108 = sbr.rel (0) target = $region33
    $region32: #{tpu_custom_call.1} parent=1 // pred_region
      _
    $region33: #{tpu_custom_call.1} parent=1 // pred_fallthru
      _
    %109 = vsyncpa [#allocation3], 1

</llo_original>
